<compile_context>
chip_gen: v7x
topology: tpu7x:2x2x1
jax: 0.10.0
libtpu: 0.0.40
codegen_flags: <defaults>
</compile_context>

<pallas_src>
import jax
import jax.numpy as jnp
from jax.experimental import pallas as pl
from jax.experimental.pallas import tpu as pltpu

_LANES = 128


def _copy_kernel(x_ref, o_ref):
    # identity copy of the current tile (straight vld/vst, no compute)
    o_ref[...] = x_ref[...]


def _sublane_align(itemsize):
    # packed-sublane granularity: f32 -> 8, bf16/f16 -> 16, int8/fp8 -> 32
    if itemsize >= 4:
        return 8
    if itemsize == 2:
        return 16
    return 32


def _round_up(x, m):
    return ((x + m - 1) // m) * m


def _device_params():
    """Return (target_tile_bytes, vmem_limit_bytes, is_megacore)."""
    kind = ""
    try:
        kind = jax.devices()[0].device_kind.lower()
    except Exception:
        pass
    vmem_bytes = None
    try:
        info = pltpu.get_tpu_info()
        vmem_bytes = getattr(info, "vmem_capacity_bytes", None)
    except Exception:
        vmem_bytes = None
    is_v7 = ("v7" in kind) or (
        vmem_bytes is not None and vmem_bytes <= 64 * 1024 * 1024
    )
    if is_v7:
        # 64 MiB VMEM, 2 TensorCores, ~3.2 TB/s HBM:
        # 4 x 6 MiB double-buffered tiles = 24 MiB, under a 32 MiB scoped cap.
        return 6 * 1024 * 1024, 32 * 1024 * 1024, True
    # v5e / v6e: 128 MiB physical VMEM, 1 TensorCore:
    # 4 x 8 MiB = 32 MiB, 48 MiB scoped cap leaves headroom.
    return 8 * 1024 * 1024, 48 * 1024 * 1024, False


def _pick_tile_rows(rows, cols, itemsize, target_tile_bytes, is_megacore):
    align = _sublane_align(itemsize)
    max_tr = max(align, (target_tile_bytes // (cols * itemsize)) // align * align)

    if not is_megacore:
        # Single-TensorCore chips (v5e/v6e): one big (possibly full-extent)
        # block when it fits — splitting small copies only adds step overhead.
        if rows <= max_tr:
            return rows
        return max_tr

    # v7x (2 TensorCores): keep the grid >= 2 and even so both cores get
    # equal halves under dimension_semantics=("parallel",).
    if rows <= align:
        return rows  # tiny: full-extent single block
    grid = max(2, pl.cdiv(rows, max_tr))
    if grid % 2:
        grid += 1
    tr = _round_up(pl.cdiv(rows, grid), align)
    return max(align, min(tr, max_tr))


def _pallas_identity_copy(flat2d, donate):
    """Copy a [rows, 128] lane-dense slab through VMEM with a tiled kernel."""
    rows, cols = flat2d.shape
    itemsize = flat2d.dtype.itemsize
    target_tile_bytes, vmem_limit, is_megacore = _device_params()
    tr = _pick_tile_rows(rows, cols, itemsize, target_tile_bytes, is_megacore)
    grid = (pl.cdiv(rows, tr),)  # ragged last block handled by Pallas

    kwargs = {}
    if donate:
        # Only alias when the caller actually donates x; otherwise XLA would
        # insert a defensive full copy (4x nbytes of HBM traffic).
        kwargs["input_output_aliases"] = {0: 0}

    return pl.pallas_call(
        _copy_kernel,
        out_shape=jax.ShapeDtypeStruct((rows, cols), flat2d.dtype),
        grid_spec=pltpu.PrefetchScalarGridSpec(
            num_scalar_prefetch=0,
            grid=grid,
            in_specs=[pl.BlockSpec((tr, cols), lambda i: (i, 0))],
            out_specs=pl.BlockSpec((tr, cols), lambda i: (i, 0)),
        ),
        compiler_params=pltpu.CompilerParams(
            dimension_semantics=("parallel",),
            vmem_limit_bytes=vmem_limit,
        ),
        cost_estimate=pl.CostEstimate(
            flops=0,
            transcendentals=0,
            bytes_accessed=2 * rows * cols * itemsize,
        ),
        **kwargs,
    )(flat2d)


def reshape_forward(x, target_shape, materialize=False, donate=False):
    """Equivalent of torch Reshape(target_shape)(x) == x.view(target_shape).

    Default path: metadata-only reshape (no kernel, no HBM traffic) — the
    fastest implementation of a contiguous view.

    materialize=True: force a lane-dense, pipelined HBM->VMEM->HBM identity
    copy through the Pallas kernel (for callers that need a fresh buffer).
    donate=True additionally lets XLA reuse the input buffer via aliasing.
    """
    if not materialize:
        return x.reshape(target_shape)

    total = x.size
    rows = total // _LANES
    rem = total - rows * _LANES

    if rows == 0 or rem != 0:
        # Fewer than 128 elements, or not a multiple of 128: a kernel would
        # need masked partial stores / an extra stitch pass that re-reads the
        # whole array — plain reshape is strictly better here.
        return x.reshape(target_shape)

    flat2d = x.reshape(rows, _LANES)
    copied = _pallas_identity_copy(flat2d, donate)
    return copied.reshape(target_shape)


if __name__ == "__main__":
    key = jax.random.PRNGKey(0)
    # small NCHW-like input: batch=2, channels=4, spatial=16x16
    x = jax.random.normal(key, (2, 4, 16, 16), dtype=jnp.float32)
    target_shape = (2, 4 * 16 * 16)  # flatten channels+spatial per batch
    ref = x.reshape(target_shape)

    # 1) default (module-equivalent) path: metadata-only reshape, no kernel
    y = jax.block_until_ready(reshape_forward(x, target_shape))
    assert y.shape == tuple(target_shape)
    assert y.dtype == x.dtype
    assert bool(jnp.array_equal(y, ref))

    # 2) opt-in materializing path: exercises the Pallas identity-copy kernel
    y_mat = jax.block_until_ready(
        reshape_forward(x, target_shape, materialize=True)
    )
    assert y_mat.shape == tuple(target_shape)
    assert y_mat.dtype == x.dtype
    assert bool(jnp.array_equal(y_mat, ref))

    # 3) ragged (non-multiple-of-128) total: dispatches to plain reshape
    x2 = jax.random.normal(jax.random.PRNGKey(1), (3, 5, 7), dtype=jnp.float32)
    y2 = jax.block_until_ready(
        reshape_forward(x2, (105,), materialize=True)
    )
    assert bool(jnp.array_equal(y2, x2.reshape(105)))

    print("KERNEL_OK")
</pallas_src>

<mosaic_0001>
module attributes {stable_mosaic.version = 11 : i64} {
  func.func @_copy_kernel(%arg0: i32, %arg1: memref<16x128xf32, #tpu.memory_space<vmem>>, %arg2: memref<16x128xf32, #tpu.memory_space<vmem>>) attributes {dimension_semantics = [#tpu.dimension_semantics<parallel>], iteration_bounds = array<i64: 1>, scalar_prefetch = 0 : i64, scratch_operands = 0 : i64, tpu.core_type = #tpu.core_type<tc>, window_params = [{transform_indices = @transform_0, window_bounds = array<i64: 16, 128>}, {transform_indices = @transform_1, window_bounds = array<i64: 16, 128>}]} {
    %c0 = arith.constant 0 : index
    %c0_0 = arith.constant 0 : index
    %0 = vector.load %arg1[%c0, %c0_0] : memref<16x128xf32, #tpu.memory_space<vmem>>, vector<16x128xf32>
    %c0_1 = arith.constant 0 : index
    %c0_2 = arith.constant 0 : index
    %1 = vector.load %arg2[%c0_1, %c0_2] : memref<16x128xf32, #tpu.memory_space<vmem>>, vector<16x128xf32>
    tpu.vector_store %arg2[%c0_1, %c0_2], %0 {strides = array<i32>} : memref<16x128xf32, #tpu.memory_space<vmem>>, vector<16x128xf32>,
    return
  }
  func.func @transform_0(%arg0: i32) -> (i32, i32) {
    %c0_i32 = arith.constant 0 : i32
    %c0_i32_0 = arith.constant 0 : i32
    return %arg0, %c0_i32 : i32, i32
  }
  func.func @transform_1(%arg0: i32) -> (i32, i32) {
    %c0_i32 = arith.constant 0 : i32
    %c0_i32_0 = arith.constant 0 : i32
    return %arg0, %c0_i32 : i32, i32
  }
}

</mosaic_0001>

<llo_original>
// kernel: tpu_custom_call.1
$region0: #{tpu_custom_call.1}
  #allocation0 [shape = 'u32[]', space=smem, size = 0x4, offset = 0x4, fixed_abs, tag = 'smem constant byte address 0x4 - core index']
  #allocation1 [shape = 'u32[144,128]{1,0:T(1,128)}', space=vmem, size = 0x12000, scoped, tag = 'internal scratch']
  %s0 = inlined_call_operand.hbm [shape: f32[16,128], index: 0, kind: input, shape index: {}]
  %s1 = inlined_call_operand.hbm [shape: f32[16,128], index: 1, kind: output, shape index: {}]
  %s2 = sld [smem:[#allocation0]]
  $region18: #{tpu_custom_call.1} parent=0
    _
  %s4 = ssub.s32 1, %s2
  %s5 = scalar_select 0, %s4, %s2
  $region1: #{tpu_custom_call.1} parent=0
    #allocation2 [shape = 'u8[8192]{0}', space=vmem, size = 0x2000, scoped, tag = 'input window, operand 0, single buffered']
    #allocation3 [shape = 's32[1]{0}', space=sflag, size = 0x4, scoped, tag = 'scoped memory for tpu_custom_call.1']
    #allocation4 [shape = 's32[1]{0}', space=sflag, size = 0x4, scoped, tag = 'scoped memory for tpu_custom_call.1']
    #allocation5 [shape = 'u8[8192]{0}', space=vmem, size = 0x2000, scoped, tag = 'output window, operand 0, single buffered']
    %6 = vsyncpa [#allocation3], 0
    %7 = vsyncpa [#allocation4], 0
    // Predicated region
    $region2: #{tpu_custom_call.1} parent=1 // pred_check
      _
    $region3: #{tpu_custom_call.1} parent=1 // pred_check_branch
      %9 = sbr.rel (0) target = $region5
    $region4: #{tpu_custom_call.1} parent=1 // pred_region
      %s11 = ssub.s32 256, 256
      %12 = vsyncadd [#allocation3], %s11
      %s13 = sshll.u32 [#allocation2], 4
      %s14 = int_to_ptr.vmem [resolvable:$true] %s13
      %19 = dma.hbm_to_vmem [thread:$0]  %s0, 256, %s14, [#allocation3], 128, 128, 8
    $region5: #{tpu_custom_call.1} parent=1 // pred_fallthru
      _
    // Predicated region
    $region6: #{tpu_custom_call.1} parent=1 // pred_check
      _
    $region7: #{tpu_custom_call.1} parent=1 // pred_check_branch
      %21 = sbr.rel (0) target = $region9
    $region8: #{tpu_custom_call.1} parent=1 // pred_region
      %22 = dma.done [#allocation3], 256
    $region9: #{tpu_custom_call.1} parent=1 // pred_fallthru
      _
    %v23 = vld [vmem:[#allocation2] sm:$0xff]
    %v24 = vld [vmem:[#allocation2 + $0x8] sm:$0xff]
    %25 = vst [vmem:[#allocation5] sm:$0xff] %v23
    %26 = vst [vmem:[#allocation5 + $0x8] sm:$0xff] %v24
    // Predicated region
    $region10: #{tpu_custom_call.1} parent=1 // pred_check
      _
    $region11: #{tpu_custom_call.1} parent=1 // pred_check_branch
      %28 = sbr.rel (0) target = $region13
    $region12: #{tpu_custom_call.1} parent=1 // pred_region
      %s30 = ssub.s32 256, 256
      %31 = vsyncadd [#allocation4], %s30
      %s32 = sshll.u32 [#allocation5], 4
      %s33 = int_to_ptr.vmem [resolvable:$true] %s32
      %38 = dma.vmem_to_hbm [thread:$0]  %s33, 256, %s1, [#allocation4], 128, 128, 8
    $region13: #{tpu_custom_call.1} parent=1 // pred_fallthru
      _
    // Predicated region
    $region14: #{tpu_custom_call.1} parent=1 // pred_check
      _
    $region15: #{tpu_custom_call.1} parent=1 // pred_check_branch
      %40 = sbr.rel (0) target = $region17
    $region16: #{tpu_custom_call.1} parent=1 // pred_region
      %41 = dma.done [#allocation4], 256
    $region17: #{tpu_custom_call.1} parent=1 // pred_fallthru
      _
    %42 = vsyncpa [#allocation3], 1
    %43 = vsyncpa [#allocation4], 1

</llo_original>
